<compile_context>
chip_gen: v5e
topology: v5e:2x2
jax: 0.10.0
libtpu: 0.0.40
codegen_flags: <defaults>
</compile_context>

<pallas_src>
import math

import jax
import jax.numpy as jnp
from jax.experimental import pallas as pl
from jax.experimental.pallas import tpu as pltpu


_LANE = 128      # vreg lane width  -> last-dim alignment for unmasked stores
_SUBLANE = 8     # vreg sublane width (32-bit rows)
# Bytes per output block. Pallas double-buffers it, so VMEM use is ~2x this
# plus the (tiny) label tile.
_BLOCK_BUDGET_BYTES = 8 * 1024 * 1024
_VMEM_LIMIT_BYTES = 32 * 1024 * 1024


def _one_hot_kernel(t_ref, o_ref):
    # t_ref block: (1, 1, TN) int32 labels (resident across class tiles).
    # o_ref block: (1, TC, TN) one-hot output tile.
    labels = t_ref[0]                                             # (1, TN)
    tc = o_ref.shape[1]
    c0 = pl.program_id(2) * tc                                    # class-tile offset
    # Class-axis-only iota; the == broadcasts it across the lane dim, so no
    # (TC, TN) int32 intermediate is ever materialized (VALU/vreg friendly).
    classes = c0 + jax.lax.broadcasted_iota(jnp.int32, (tc, 1), 0)  # (TC, 1)
    o_ref[0] = (labels == classes).astype(o_ref.dtype)            # (TC, TN)


def _select_tiles(n_classes, N, out_dtype):
    """Spatial/lane tile first (contiguity), class tile from the leftover budget."""
    itemsize = jnp.dtype(out_dtype).itemsize
    # Sub-32-bit dtypes pack along sublanes: 8 rows (f32), 16 (bf16), 32 (int8).
    sublane_pack = _SUBLANE * max(1, 4 // itemsize)
    budget_elems = _BLOCK_BUDGET_BYTES // itemsize

    # 1) Spatial/lane tile: take the full N if it fits (whole block is one
    #    contiguous HBM slab); otherwise as many 128-lane groups as the budget
    #    allows while leaving room for at least one sublane-pack of classes.
    max_lanes = max(_LANE, (budget_elems // sublane_pack) // _LANE * _LANE)
    tn = N if N <= max_lanes else max_lanes

    # 2) Class tile from the leftover budget, rounded to the dtype's sublane
    #    packing so stores stay unmasked / packing-aligned.
    max_tc = max(sublane_pack,
                 (budget_elems // tn) // sublane_pack * sublane_pack)
    tc = n_classes if n_classes <= max_tc else max_tc
    return tc, tn


def _dimension_semantics():
    # v7x has 2 TensorCores sharing ~3.2 TB/s HBM: split the (leading) batch
    # axis across them so both cores issue writeback DMAs. Single-TC chips
    # (v5e/v6e) keep plain "parallel" (near-zero codegen impact there).
    try:
        kind = jax.devices()[0].device_kind.lower()
    except Exception:
        kind = ""
    if "v7" in kind and hasattr(pltpu, "CORE_PARALLEL"):
        return (pltpu.CORE_PARALLEL, pltpu.PARALLEL, pltpu.PARALLEL)
    return ("parallel", "parallel", "parallel")


def one_hot_encoder(t, n_classes, *, out_dtype=jnp.float32):
    """Pallas equivalent of OneHotEncoder.forward.

    t: integer labels of shape (B, d1, ..., dk).
    Returns `out_dtype` (default float32, matching the PyTorch `.float()`)
    array of shape (B, n_classes, d1, ..., dk). Pass out_dtype=jnp.bfloat16
    (or int8) to halve/quarter the HBM writeback when downstream allows.
    """
    t = t.astype(jnp.int32)                 # t.data.long()
    B = t.shape[0]
    spatial = t.shape[1:]
    N = math.prod(spatial) if spatial else 1

    # Lane-dense layout: flatten spatial dims; keep a size-1 middle axis so the
    # input block's second-to-last dim trivially satisfies the (8, 128) rule.
    labels = t.reshape(B, 1, N)

    tc, tn = _select_tiles(n_classes, N, out_dtype)
    grid = (B, pl.cdiv(N, tn), pl.cdiv(n_classes, tc))

    out_flat = pl.pallas_call(
        _one_hot_kernel,
        out_shape=jax.ShapeDtypeStruct((B, n_classes, N), out_dtype),
        grid_spec=pl.GridSpec(
            grid=grid,
            # Class axis (innermost) is ignored -> label tile stays resident.
            in_specs=[pl.BlockSpec((1, 1, tn), lambda b, s, c: (b, 0, s))],
            out_specs=pl.BlockSpec((1, tc, tn), lambda b, s, c: (b, c, s)),
        ),
        compiler_params=pltpu.CompilerParams(
            dimension_semantics=_dimension_semantics(),
            vmem_limit_bytes=_VMEM_LIMIT_BYTES,
        ),
    )(labels)

    return out_flat.reshape((B, n_classes) + spatial)


if __name__ == "__main__":
    key = jax.random.PRNGKey(0)
    B, H, W = 2, 16, 16
    n_classes = 4

    # Deterministic integer class labels in [0, n_classes).
    t = jax.random.randint(key, (B, H, W), 0, n_classes, dtype=jnp.int32)

    out = one_hot_encoder(t, n_classes)
    out = jax.block_until_ready(out)

    # Pure-JAX reference: eye(C)[t] -> (B,H,W,C) -> permute to (B,C,H,W).
    ref = jnp.transpose(jax.nn.one_hot(t, n_classes, dtype=jnp.float32),
                        (0, 3, 1, 2))
    assert out.shape == (B, n_classes, H, W)
    assert out.dtype == jnp.float32
    assert bool(jnp.all(out == ref))

    # Exercise the dtype-aware tiling path (bf16 output): values are exactly
    # 0.0 / 1.0 so the comparison is exact.
    out_bf16 = jax.block_until_ready(
        one_hot_encoder(t, n_classes, out_dtype=jnp.bfloat16))
    assert out_bf16.dtype == jnp.bfloat16
    assert bool(jnp.all(out_bf16.astype(jnp.float32) == ref))

    print("KERNEL_OK")
</pallas_src>

<mosaic_0001>
module attributes {stable_mosaic.version = 11 : i64} {
  func.func @_one_hot_kernel(%arg0: i32, %arg1: i32, %arg2: i32, %arg3: memref<1x1x256xi32, #tpu.memory_space<vmem>>, %arg4: memref<1x4x256xf32, #tpu.memory_space<vmem>>) attributes {dimension_semantics = [#tpu.dimension_semantics<parallel>, #tpu.dimension_semantics<parallel>, #tpu.dimension_semantics<parallel>], iteration_bounds = array<i64: 2, 1, 1>, scalar_prefetch = 0 : i64, scratch_operands = 0 : i64, tpu.core_type = #tpu.core_type<tc>, window_params = [{transform_indices = @transform_0, window_bounds = array<i64: 1, 1, 256>}, {transform_indices = @transform_1, window_bounds = array<i64: 1, 4, 256>}]} {
    %c0 = arith.constant 0 : index
    %c0_0 = arith.constant 0 : index
    %c0_1 = arith.constant 0 : index
    %0 = vector.load %arg3[%c0, %c0_0, %c0_1] : memref<1x1x256xi32, #tpu.memory_space<vmem>>, vector<1x1x256xi32>
    %1 = vector.shape_cast %0 : vector<1x1x256xi32> to vector<1x256xi32>
    %c4_i32 = arith.constant 4 : i32
    %2 = arith.muli %arg2, %c4_i32 : i32
    %3 = tpu.iota {dimensions = array<i32: 0>} : vector<4x1xi32>
    %4 = vector.broadcast %2 : i32 to vector<4x1xi32>
    %5 = arith.addi %4, %3 : vector<4x1xi32>
    %6 = vector.broadcast %1 : vector<1x256xi32> to vector<4x256xi32>
    %7 = vector.broadcast %5 : vector<4x1xi32> to vector<4x256xi32>
    %8 = arith.cmpi eq, %6, %7 : vector<4x256xi32>
    %9 = arith.extui %8 : vector<4x256xi1> to vector<4x256xi32>
    %10 = arith.sitofp %9 : vector<4x256xi32> to vector<4x256xf32>
    %c0_2 = arith.constant 0 : index
    %c0_3 = arith.constant 0 : index
    %c0_4 = arith.constant 0 : index
    %11 = vector.load %arg4[%c0_2, %c0_3, %c0_4] : memref<1x4x256xf32, #tpu.memory_space<vmem>>, vector<1x4x256xf32>
    %12 = vector.shape_cast %11 : vector<1x4x256xf32> to vector<4x256xf32>
    %13 = vector.shape_cast %10 : vector<4x256xf32> to vector<1x4x256xf32>
    tpu.vector_store %arg4[%c0_2, %c0_3, %c0_4], %13 {strides = array<i32>} : memref<1x4x256xf32, #tpu.memory_space<vmem>>, vector<1x4x256xf32>,
    return
  }
  func.func @transform_0(%arg0: i32, %arg1: i32, %arg2: i32) -> (i32, i32, i32) {
    %c0_i32 = arith.constant 0 : i32
    %c0_i32_0 = arith.constant 0 : i32
    return %arg0, %c0_i32, %arg1 : i32, i32, i32
  }
  func.func @transform_1(%arg0: i32, %arg1: i32, %arg2: i32) -> (i32, i32, i32) {
    %c0_i32 = arith.constant 0 : i32
    return %arg0, %arg2, %arg1 : i32, i32, i32
  }
}

</mosaic_0001>

<llo_original>
// kernel: tpu_custom_call.1
$region0: #{tpu_custom_call.1}
  #allocation0 [shape = 'u32[]', space=smem, size = 0x4, offset = 0x4, fixed_abs, tag = 'smem constant byte address 0x4 - core index']
  #allocation1 [shape = 'u32[72,128]{1,0:T(1,128)}', space=vmem, size = 0x9000, scoped, tag = 'internal scratch']
  %s0 = inlined_call_operand.hbm [shape: s32[2,1,256], index: 0, kind: input, shape index: {}]
  %s1 = inlined_call_operand.hbm [shape: f32[2,4,256], index: 1, kind: output, shape index: {}]
  %s2 = sld [smem:[#allocation0]]
  $region41: #{tpu_custom_call.1} parent=0
    _
  %s4 = ssub.s32 1, %s2
  %s5 = scalar_select 0, %s4, %s2
  $region1: #{tpu_custom_call.1} parent=0
    #allocation2 [shape = 'u8[2048]{0}', space=vmem, size = 0x800, scoped, tag = 'input window, operand 0']
    #allocation3 [shape = 's32[2]{0}', space=sflag, size = 0x8, scoped, tag = 'scoped memory for tpu_custom_call.1']
    #allocation4 [shape = 's32[2]{0}', space=sflag, size = 0x8, scoped, tag = 'scoped memory for tpu_custom_call.1']
    #allocation5 [shape = 'u8[8192]{0}', space=vmem, size = 0x2000, scoped, tag = 'output window, operand 0']
    %6 = vsyncpa [#allocation3], 0
    %s7 = scalar_lea.sflag [#allocation3], 1
    %8 = vsyncpa %s7, 0
    %9 = vsyncpa [#allocation4], 0
    %s10 = scalar_lea.sflag [#allocation4], 1
    %11 = vsyncpa %s10, 0
    loop: start=0, step=1, limit=4
    $region2: #{tpu_custom_call.1} parent=1 // loop_pre_header
      _
    $region3: #{tpu_custom_call.1} parent=1 // loop_header
      %s13 = sphi 0, %s17
      %p14 = scmp.ge.s32.totalorder %s13, 4
      %s20 = sphi 0, %s39
      %s21 = sphi 0, %s35
      %s22 = sphi 0, %s31
      %s23 = sphi 0, %s20
      %s24 = sphi 0, %s21
      %s25 = sphi 0, %s22
      %s26 = sphi 0, %s23
      %s27 = sphi 0, %s24
      %s28 = sphi 0, %s25
      %s44 = sphi 0, %s46
      %s47 = sphi 0, %s44
      %s48 = sphi 0, %s47
      %s64 = sphi 0, %s48
      %s74 = sphi 0, %s76
      %s77 = sphi 0, %s74
      %s78 = sphi 0, %s77
      %s94 = sphi 0, %s78
    $region4: #{tpu_custom_call.1} parent=1 // loop_header_branch
      %16 = sbr.rel (%p14) target = $region8
    $region5: #{tpu_custom_call.1} parent=1 // loop_body
      %s18 = ssub.s32 %s13, 1
      %s19 = ssub.s32 %s13, 2
      %s29 = sadd.s32 1, %s22
      %p30 = scmp.ge.s32.totalorder %s29, 1
      %s31 = scalar_select %p30, 0, %s29
      %s32 = sadd.s32 1, %s21
      %s33 = scalar_select %p30, %s32, %s21
      %p34 = scmp.ge.s32.totalorder %s33, 1
      %s35 = scalar_select %p34, 0, %s33
      %s36 = sadd.s32 1, %s20
      %s37 = scalar_select %p34, %s36, %s20
      %p38 = scmp.ge.s32.totalorder %s37, 2
      %s39 = scalar_select %p38, 0, %s37
      %s40 = ssub.s32 %s20, %s39
      %s41 = ssub.s32 %s21, %s35
      %s42 = sor.u32 %s40, %s41
      %p43 = scmp.eq.s32.totalorder %s42, 0
      %s45 = sadd.s32 %s44, 1
      %s46 = scalar_select %p43, %s44, %s45
      %p49 = pneg %p43
      %p50 = scmp.eq.s32.totalorder %s13, 1
      %p51 = por %p49, %p50
      %p52 = scmp.ne.s32.totalorder %s44, %s47
      %p53 = scmp.eq.s32.totalorder %s13, 0
      %p54 = por %p52, %p53
      %p55 = scmp.ne.s32.totalorder %s44, %s47
      %p56 = scmp.eq.s32.totalorder %s18, 1
      %p57 = por %p55, %p56
      %p58 = scmp.ne.s32.totalorder %s47, %s48
      %p59 = scmp.eq.s32.totalorder %s18, 0
      %p60 = por %p58, %p59
      %p61 = scmp.ne.s32.totalorder %s47, %s48
      %p62 = scmp.eq.s32.totalorder %s19, 1
      %p63 = por %p61, %p62
      %p65 = scmp.ne.s32.totalorder %s48, %s64
      %p66 = scmp.eq.s32.totalorder %s19, 0
      %p67 = por %p65, %p66
      %s68 = ssub.s32 %s20, %s39
      %s69 = ssub.s32 %s22, %s31
      %s70 = sor.u32 %s68, %s69
      %s71 = ssub.s32 %s21, %s35
      %s72 = sor.u32 %s70, %s71
      %p73 = scmp.eq.s32.totalorder %s72, 0
      %s75 = sadd.s32 %s74, 1
      %s76 = scalar_select %p73, %s74, %s75
      %p79 = pneg %p73
      %p80 = scmp.eq.s32.totalorder %s13, 1
      %p81 = por %p79, %p80
      %p82 = scmp.ne.s32.totalorder %s74, %s77
      %p83 = scmp.eq.s32.totalorder %s13, 0
      %p84 = por %p82, %p83
      %p85 = scmp.ne.s32.totalorder %s74, %s77
      %p86 = scmp.eq.s32.totalorder %s18, 1
      %p87 = por %p85, %p86
      %p88 = scmp.ne.s32.totalorder %s77, %s78
      %p89 = scmp.eq.s32.totalorder %s18, 0
      %p90 = por %p88, %p89
      %p91 = scmp.ne.s32.totalorder %s77, %s78
      %p92 = scmp.eq.s32.totalorder %s19, 1
      %p93 = por %p91, %p92
      %p95 = scmp.ne.s32.totalorder %s78, %s94
      %p96 = scmp.eq.s32.totalorder %s19, 0
      %p97 = por %p95, %p96
      %p98 = scmp.le.s32.totalorder 1, %s13
      %p99 = scmp.lt.s32.totalorder %s13, 3
      %p100 = pnand %p98, %p99
      %p101 = pneg %p100
      // Predicated region
      $region9: #{tpu_custom_call.1} parent=5 // pred_check
        _
      $region10: #{tpu_custom_call.1} parent=5 // pred_check_branch
        %103 = sbr.rel (%p100) target = $region12
      $region11: #{tpu_custom_call.1} parent=5 // pred_region
        %s104 = ssub.s32 %s13, 1
      $region12: #{tpu_custom_call.1} parent=5 // pred_fallthru
        _
      %p105 = scmp.lt.s32.totalorder %s13, 2
      // Predicated region
      $region13: #{tpu_custom_call.1} parent=5 // pred_check
        %p106 = pneg %p105
      $region14: #{tpu_custom_call.1} parent=5 // pred_check_branch
        %108 = sbr.rel (%p106) target = $region16
      $region15: #{tpu_custom_call.1} parent=5 // pred_region
        // Predicated region
        $region17: #{tpu_custom_call.1} parent=15 // pred_check
          %p109 = pneg %p54
        $region18: #{tpu_custom_call.1} parent=15 // pred_check_branch
          %111 = sbr.rel (%p109) target = $region20
        $region19: #{tpu_custom_call.1} parent=15 // pred_region
          %s112 = sand.u32 %s44, 1
          %s113 = scalar_lea.sflag [#allocation3], %s112
          %s114 = sand.u32 %s44, 1
          %s115 = smul.addr %s114, 2
          %s116 = scalar_lea.vmem [#allocation2], %s115
          %s117 = smul.u32 2, %s21
          %119 = vsyncadd %s113, 0
          %s120 = smul.addr %s20, 2
          %s121 = sadd.s32 %s117, %s120
          %s122 = scalar_lea.hbm %s0, %s121
          %s124 = sshll.u32 %s122, 4
          %s125 = int_to_ptr.hbm [resolvable:$true] %s124
          %s126 = sshll.u32 %s116, 4
          %s127 = int_to_ptr.vmem [resolvable:$true] %s126
          %129 = dma.hbm_to_vmem [thread:$0]  %s125, 32, %s127, %s113
        $region20: #{tpu_custom_call.1} parent=15 // pred_fallthru
          _
      $region16: #{tpu_custom_call.1} parent=5 // pred_fallthru
        _
      %p130 = scmp.le.s32.totalorder 1, %s13
      %p131 = scmp.lt.s32.totalorder %s13, 3
      %p132 = pnand %p130, %p131
      %p133 = pneg %p132
      // Predicated region
      $region21: #{tpu_custom_call.1} parent=5 // pred_check
        _
      $region22: #{tpu_custom_call.1} parent=5 // pred_check_branch
        %135 = sbr.rel (%p132) target = $region24
      $region23: #{tpu_custom_call.1} parent=5 // pred_region
        %s136 = ssub.s32 %s13, 1
        %s137 = sand.u32 %s47, 1
        %s138 = scalar_lea.sflag [#allocation3], %s137
        %s139 = sand.u32 %s47, 1
        %s140 = smul.addr %s139, 2
        %s141 = scalar_lea.vmem [#allocation2], %s140
        // Predicated region
        $region25: #{tpu_custom_call.1} parent=23 // pred_check
          %p142 = pneg %p60
        $region26: #{tpu_custom_call.1} parent=23 // pred_check_branch
          %144 = sbr.rel (%p142) target = $region28
        $region27: #{tpu_custom_call.1} parent=23 // pred_region
          %146 = dma.done %s138, 32
        $region28: #{tpu_custom_call.1} parent=23 // pred_fallthru
          _
        %s147 = sand.u32 %s47, 1
        %s148 = scalar_lea.sflag [#allocation3], %s147
        %s149 = sand.u32 %s47, 1
        %s150 = smul.addr %s149, 2
        %s151 = scalar_lea.vmem [#allocation2], %s150
        %p152 = pneg %p60
        %p153 = pneg %p57
        %p154 = pneg %p90
        %p155 = pneg %p87
        %s156 = sand.u32 %s77, 1
        %s157 = scalar_lea.sflag [#allocation4], %s156
        %s158 = sand.u32 %s77, 1
        %s159 = smul.addr %s158, 8
        %s160 = scalar_lea.vmem [#allocation5], %s159
        %s161 = smul.u32 2, %s24
        %s162 = smul.u32 2, %s24
        %v163 = vld [vmem:[%s141] sm:$0x3]
        %s164 = smul.u32 %s25, 4
        %v165 = vlaneseq
        %v166 = vshrl.u32 %v165, 7
        %v167 = vstv %s164
        %v168 = vadd.s32 %v167, %v166
        %v169 = vperm.slane %v163, 0
        %v170 = vperm.slane %v163, 1
        %vm171 = vcmp.eq.s32.totalorder %v169, %v168
        %vm172 = vcmp.eq.s32.totalorder %v170, %v168
        %v173 = vsel %vm171, 1, 0
        %v174 = vsel %vm172, 1, 0
        %v175 = vcvt.s32.f32 %v173
        %v176 = vcvt.s32.f32 %v174
        %v179 = vrot.slane %v176, 4
        %vm180 = vcmask 1043456
        %v181 = vsel %vm180, %v175, %v179
        %183 = vst [vmem:[%s160] sm:$0xff] %v181
        %s184 = sand.u32 %s77, 1
        %s185 = scalar_lea.sflag [#allocation4], %s184
        %s186 = sand.u32 %s77, 1
        %s187 = smul.addr %s186, 8
        %s188 = scalar_lea.vmem [#allocation5], %s187
        // Predicated region
        $region29: #{tpu_custom_call.1} parent=23 // pred_check
          %p189 = pneg %p87
        $region30: #{tpu_custom_call.1} parent=23 // pred_check_branch
          %191 = sbr.rel (%p189) target = $region32
        $region31: #{tpu_custom_call.1} parent=23 // pred_region
          %s192 = smul.u32 2, %s24
          %194 = vsyncadd %s185, 0
          %s195 = smul.addr %s25, 2
          %s196 = sadd.s32 %s192, %s195
          %s197 = smul.addr %s23, 2
          %s198 = sadd.s32 %s196, %s197
          %s199 = smul.addr %s198, 4
          %s200 = scalar_lea.hbm %s1, %s199
          %s202 = sshll.u32 %s188, 4
          %s203 = int_to_ptr.vmem [resolvable:$true] %s202
          %s204 = sshll.u32 %s200, 4
          %s205 = int_to_ptr.hbm [resolvable:$true] %s204
          %207 = dma.vmem_to_hbm [thread:$0]  %s203, 128, %s205, %s185
        $region32: #{tpu_custom_call.1} parent=23 // pred_fallthru
          _
      $region24: #{tpu_custom_call.1} parent=5 // pred_fallthru
        _
      %p208 = scmp.le.s32.totalorder 2, %s13
      // Predicated region
      $region33: #{tpu_custom_call.1} parent=5 // pred_check
        %p209 = pneg %p208
      $region34: #{tpu_custom_call.1} parent=5 // pred_check_branch
        %211 = sbr.rel (%p209) target = $region36
      $region35: #{tpu_custom_call.1} parent=5 // pred_region
        %s212 = ssub.s32 %s13, 2
        // Predicated region
        $region37: #{tpu_custom_call.1} parent=35 // pred_check
          %p213 = pneg %p93
        $region38: #{tpu_custom_call.1} parent=35 // pred_check_branch
          %215 = sbr.rel (%p213) target = $region40
        $region39: #{tpu_custom_call.1} parent=35 // pred_region
          %s216 = sand.u32 %s78, 1
          %s217 = scalar_lea.sflag [#allocation4], %s216
          %s218 = sand.u32 %s78, 1
          %s219 = smul.addr %s218, 8
          %s220 = scalar_lea.vmem [#allocation5], %s219
          %222 = dma.done %s217, 128
        $region40: #{tpu_custom_call.1} parent=35 // pred_fallthru
          _
      $region36: #{tpu_custom_call.1} parent=5 // pred_fallthru
        _
    $region6: #{tpu_custom_call.1} parent=1 // loop_footer
      %s17 = sadd.s32 1, %s13
    $region7: #{tpu_custom_call.1} parent=1 // loop_footer_branch
      %12 = sbr.rel target = $region3
    $region8: #{tpu_custom_call.1} parent=1 // loop_exit
      _
    %223 = vsyncpa [#allocation3], 1
    %s224 = scalar_lea.sflag [#allocation3], 1
    %225 = vsyncpa %s224, 1
    %226 = vsyncpa [#allocation4], 1
    %s227 = scalar_lea.sflag [#allocation4], 1
    %228 = vsyncpa %s227, 1

</llo_original>
